<compile_context>
chip_gen: v5e
topology: v5e:2x2
jax: 0.10.0
libtpu: 0.0.40
codegen_flags: <defaults>
</compile_context>

<pallas_src>
import functools

import jax
import jax.numpy as jnp
from jax import lax
from jax.experimental import pallas as pl
from jax.experimental.pallas import tpu as pltpu


def _round_up(x, m):
    return (x + m - 1) // m * m


def _loss_kernel(q_ref, kblk_ref, labk_ref, labc_ref, queue_ref, labq_ref,
                 out_ref, m_sc, l_sc, sml_sc, msum_sc, *, n_keys, tile_n):
    """Streaming masked log-softmax loss over the columns [k.T | queue]."""
    j = pl.program_id(0)
    lab_col = labc_ref[...]                                   # (B, 1) query labels

    def accumulate(keys, lab_row, valid):
        # (B, W) logits; f32 accumulation on the MXU. 1/T is pre-folded into q.
        logits = jnp.dot(q_ref[...], keys, preferred_element_type=jnp.float32)
        if valid is not None:                                 # static: ragged tail only
            logits = jnp.where(valid, logits, -1e30)
            mask = (lab_row == lab_col) & valid
        else:
            mask = lab_row == lab_col                         # NaN labels (cr==0) never match
        m_new = jnp.maximum(m_sc[...], jnp.max(logits, axis=1, keepdims=True))
        alpha = jnp.exp(m_sc[...] - m_new)
        l_sc[...] = alpha * l_sc[...] + jnp.sum(jnp.exp(logits - m_new),
                                                axis=1, keepdims=True)
        m_sc[...] = m_new
        sml_sc[...] += jnp.sum(jnp.where(mask, logits, 0.0), axis=1, keepdims=True)
        msum_sc[...] += jnp.sum(mask.astype(jnp.float32), axis=1, keepdims=True)

    # ---- step 0: init accumulators, fold in the tiny resident k.T block once ----
    @pl.when(j == 0)
    def _init():
        m_sc[...] = jnp.full_like(m_sc, -1e30)
        l_sc[...] = jnp.zeros_like(l_sc)
        sml_sc[...] = jnp.zeros_like(sml_sc)
        msum_sc[...] = jnp.zeros_like(msum_sc)
        accumulate(kblk_ref[...], labk_ref[...], None)

    # ---- every step: one streamed (dim, tile_n) queue block ----
    if n_keys % tile_n != 0:
        # static ragged tail: kill out-of-range columns (garbage block padding)
        col = lax.broadcasted_iota(jnp.int32, (1, tile_n), 1)
        valid = (j * tile_n + col) < n_keys
    else:
        valid = None
    accumulate(queue_ref[...], labq_ref[...], valid)

    # ---- last step: finalize the per-row loss (single store) ----
    @pl.when(j == pl.num_programs(0) - 1)
    def _fin():
        lse = m_sc[...] + jnp.log(l_sc[...])                  # (B, 1) row log-sum-exp
        msum = msum_sc[...]
        msum_safe = jnp.where(msum > 0.0, msum, 1.0)
        out_ref[...] = -(sml_sc[...] - msum * lse) / msum_safe


@functools.partial(jax.jit, static_argnames=("T", "tile_n"),
                   donate_argnums=(3, 4, 5, 6))
def feature_cache_forward(q, k, label, queue, label_queue, cr_mask_queue,
                          queue_ptr, cr_mask=None, *, T=0.07, tile_n=None):
    """Forward pass + queue update of the PyTorch FeatureCache module.

    Returns (loss, new_queue, new_label_queue, new_cr_mask_queue, new_ptr).
    queue / label_queue / cr_mask_queue / queue_ptr are donated (in-place
    under jit).  queue.dtype controls the matmul operand dtype; pass a bf16
    queue to halve its HBM traffic (accumulation stays f32).
    """
    B, dim = q.shape
    dim_q, K = queue.shape
    assert dim_q == dim, "q and queue feature dims must match"
    assert B <= K, "FeatureCache assumes batch_size <= K"
    mm_dtype = queue.dtype
    itemsize = jnp.dtype(mm_dtype).itemsize

    # Fold 1/T into q once (B x dim) so the kernel has no per-element scale.
    q_mm = (q.astype(jnp.float32) * (1.0 / T)).astype(mm_dtype)
    k_blk = k.astype(mm_dtype).T                              # (dim, B) resident

    # Labels as f32 (float equality, like PyTorch).  Binary cr_mask folded in
    # by setting the label to NaN where cr == 0 (NaN never compares equal).
    lab_col = label.astype(jnp.float32).reshape(B, 1)
    labk = label.astype(jnp.float32)
    labq = label_queue.astype(jnp.float32)
    if cr_mask is not None:
        labk = jnp.where(cr_mask != 0, labk, jnp.nan)
        labq = jnp.where(cr_mask_queue != 0, labq, jnp.nan)
    labk_row = labk.reshape(1, B)
    labq_row = labq.reshape(1, K)

    # ---- tile sizing: ~2 MiB of streamed queue bytes per grid step, capped so
    #      the (B, tile_n) f32 intermediates stay within ~512 KiB (vreg pressure).
    if tile_n is None:
        t_bytes = (2 * 1024 * 1024) // max(1, dim * itemsize)
        t_vreg = (512 * 1024) // (4 * B)
        tile_n = max(512, min(t_bytes, t_vreg))
    tile_n = max(128, min(int(tile_n), _round_up(K, 128)))
    tile_n = (tile_n // 128) * 128
    grid = (pl.cdiv(K, tile_n),)          # queue is NEVER padded; tail masked in-kernel

    # ---- explicit VMEM budget: 2x streamed tiles + 2x residents + temporaries.
    streamed = dim * tile_n * itemsize + tile_n * 4           # queue tile + label row tile
    resident = B * dim * itemsize + dim * B * itemsize + B * 4 + B * 4
    temps = 4 * B * tile_n * 4 + 5 * B * 4                    # (B,tile_n) f32 temps + scratch/out
    need = 2 * (streamed + resident) + temps
    vmem_limit = int(min(48 * 1024 * 1024,                    # safe on v7x's 64 MiB/TC
                         max(32 * 1024 * 1024, int(need * 1.5))))

    kernel = functools.partial(_loss_kernel, n_keys=K, tile_n=tile_n)
    per_row = pl.pallas_call(
        kernel,
        out_shape=jax.ShapeDtypeStruct((B, 1), jnp.float32),
        grid_spec=pltpu.PrefetchScalarGridSpec(
            num_scalar_prefetch=0,
            grid=grid,
            in_specs=[
                pl.BlockSpec((B, dim), lambda j: (0, 0)),       # q * 1/T       (resident)
                pl.BlockSpec((dim, B), lambda j: (0, 0)),       # k.T           (resident)
                pl.BlockSpec((1, B), lambda j: (0, 0)),         # k labels      (resident)
                pl.BlockSpec((B, 1), lambda j: (0, 0)),         # query labels  (resident)
                pl.BlockSpec((dim, tile_n), lambda j: (0, j)),  # queue tile    (streamed)
                pl.BlockSpec((1, tile_n), lambda j: (0, j)),    # queue labels  (streamed)
            ],
            out_specs=pl.BlockSpec((B, 1), lambda j: (0, 0)),   # per-row loss, written once
            scratch_shapes=[pltpu.VMEM((B, 1), jnp.float32)] * 4,  # m, l, sum(mask*logits), mask_sum
        ),
        compiler_params=pltpu.CompilerParams(
            dimension_semantics=("arbitrary",),   # online-softmax carry across N tiles
            vmem_limit_bytes=vmem_limit),
    )(q_mm, k_blk, labk_row, lab_col, queue, labq_row)
    loss = jnp.mean(per_row)                                   # matches torch loss.mean()

    # ---- _dequeue_and_enqueue on donated buffers (in place under jit) -------
    # Common (no-wrap) case: contiguous column-block write via dynamic_update_slice.
    # Rare wrap case (ptr + B > K): modular-index scatter fallback.
    k_cols = k.astype(queue.dtype).T                           # (dim, B)
    lab_new = label.astype(label_queue.dtype)
    ptr = queue_ptr.astype(jnp.int32)

    def _enqueue_contig(bufs):
        qbuf, lbuf, crbuf = bufs
        qbuf = lax.dynamic_update_slice(qbuf, k_cols, (jnp.int32(0), ptr))
        lbuf = lax.dynamic_update_slice(lbuf, lab_new, (ptr,))
        if cr_mask is not None:
            crbuf = lax.dynamic_update_slice(crbuf, cr_mask.astype(crbuf.dtype), (ptr,))
        return qbuf, lbuf, crbuf

    def _enqueue_wrap(bufs):
        qbuf, lbuf, crbuf = bufs
        idx = (ptr + jnp.arange(B, dtype=jnp.int32)) % K
        qbuf = qbuf.at[:, idx].set(k_cols)
        lbuf = lbuf.at[idx].set(lab_new)
        if cr_mask is not None:
            crbuf = crbuf.at[idx].set(cr_mask.astype(crbuf.dtype))
        return qbuf, lbuf, crbuf

    new_queue, new_label_queue, new_cr_queue = lax.cond(
        ptr + B <= K, _enqueue_contig, _enqueue_wrap,
        (queue, label_queue, cr_mask_queue))
    new_ptr = ((ptr + B) % K).astype(queue_ptr.dtype)

    return loss, new_queue, new_label_queue, new_cr_queue, new_ptr


def _reference_loss(q, k, label, queue_f32, label_queue, cr_mask_queue, T,
                    cr_mask=None, mm_dtype=jnp.float32):
    """Pure-JAX port of FeatureCache.forward's loss (no queue update)."""
    qe = jnp.concatenate([k.T, queue_f32], axis=1).astype(mm_dtype)
    le = jnp.concatenate([label, label_queue], axis=0)
    logits = jnp.dot(q.astype(mm_dtype), qe,
                     preferred_element_type=jnp.float32) / T
    mask = (le[None, :] == label[:, None]).astype(jnp.float32)
    if cr_mask is not None:
        cre = jnp.concatenate([cr_mask, cr_mask_queue], axis=0)
        mask = mask * cre.astype(jnp.float32)[None, :]
    lmax = logits.max(axis=1, keepdims=True)
    sh = logits - lmax
    lp = sh - jnp.log(jnp.exp(sh).sum(1, keepdims=True))
    ms = mask.sum(1)
    ms = jnp.where(ms > 0, ms, 1.0)
    return (-(mask * lp).sum(1) / ms).mean()


if __name__ == "__main__":
    B, dim, K = 8, 32, 1024
    T = 0.07
    TILE_N = 256

    root = jax.random.PRNGKey(0)
    kq, kk, kl, kqu, klq, kcrq, kcrb = jax.random.split(root, 7)

    q = jax.random.normal(kq, (B, dim), jnp.float32)
    k_feat = jax.random.normal(kk, (B, dim), jnp.float32)
    label = jax.random.randint(kl, (B,), 0, 4).astype(jnp.float32)

    def fresh_queue(dtype, n_cols=K):
        qv = jax.random.normal(kqu, (dim, n_cols), jnp.float32)
        qv = qv / jnp.linalg.norm(qv, axis=0, keepdims=True)
        return qv.astype(dtype)

    def fresh_label_queue(n_cols=K):
        lq = -jnp.ones((n_cols,), jnp.float32)
        # fill half the queue with real labels so queue columns hit positives
        return lq.at[: n_cols // 2].set(
            jax.random.randint(klq, (n_cols // 2,), 0, 4).astype(jnp.float32))

    # ---------------- test 1: f32 queue, cr_mask=None, streamed tiles ----------------
    queue1 = fresh_queue(jnp.float32)
    lq1 = fresh_label_queue()
    crq1 = jnp.zeros((K,), jnp.int32)
    ref1 = _reference_loss(q, k_feat, label, queue1, lq1, crq1, T)
    loss1, nq1, nlq1, ncr1, nptr1 = feature_cache_forward(
        q, k_feat, label, queue1, lq1, crq1, jnp.zeros((), jnp.int32),
        None, T=T, tile_n=TILE_N)
    loss1 = jax.block_until_ready(loss1)
    assert jnp.allclose(loss1, ref1, rtol=2e-2, atol=2e-2), (float(loss1), float(ref1))
    assert int(nptr1) == B
    assert jnp.allclose(nq1[:, :B], k_feat.T)        # contiguous enqueue path
    assert jnp.allclose(nlq1[:B], label)

    # ---------------- test 2: bf16 queue + cr_mask path, auto tile sizing ----------------
    queue2 = fresh_queue(jnp.bfloat16)
    lq2 = fresh_label_queue()
    crq2 = jax.random.randint(kcrq, (K,), 0, 2)            # binary cr mask in queue
    cr_mask = jax.random.randint(kcrb, (B,), 0, 2)         # binary cr mask for batch
    ref2 = _reference_loss(q, k_feat, label, queue2.astype(jnp.float32),
                           lq2, crq2, T, cr_mask=cr_mask, mm_dtype=jnp.bfloat16)
    loss2, nq2, nlq2, ncr2, nptr2 = feature_cache_forward(
        q, k_feat, label, queue2, lq2, crq2, jnp.zeros((), jnp.int32),
        cr_mask, T=T)                                       # tile_n=None -> auto
    loss2 = jax.block_until_ready(loss2)
    assert jnp.allclose(loss2, ref2, rtol=2e-2, atol=2e-2), (float(loss2), float(ref2))

    # ---------------- test 3: queue-pointer wrap-around (ptr + B > K) ----------------
    queue3 = fresh_queue(jnp.float32)
    lq3 = fresh_label_queue()
    crq3 = jnp.zeros((K,), jnp.int32)
    ptr3_in = jnp.array(K - 3, jnp.int32)
    _, nq3, nlq3, _, nptr3 = feature_cache_forward(
        q, k_feat, label, queue3, lq3, crq3, ptr3_in, None, T=T, tile_n=TILE_N)
    idx = (K - 3 + jnp.arange(B)) % K
    assert jnp.allclose(nlq3[idx], label)
    assert jnp.allclose(nq3[:, idx], k_feat.T)
    assert int(nptr3) == (K - 3 + B) % K

    # ---------------- test 4: ragged K (K % tile_n != 0) -> in-kernel tail mask ----------------
    K2 = 1100
    queue4 = fresh_queue(jnp.float32, K2)
    lq4 = fresh_label_queue(K2)
    crq4 = jnp.zeros((K2,), jnp.int32)
    ref4 = _reference_loss(q, k_feat, label, queue4, lq4, crq4, T)
    loss4, _, _, _, nptr4 = feature_cache_forward(
        q, k_feat, label, queue4, lq4, crq4, jnp.zeros((), jnp.int32),
        None, T=T, tile_n=TILE_N)
    loss4 = jax.block_until_ready(loss4)
    assert jnp.allclose(loss4, ref4, rtol=2e-2, atol=2e-2), (float(loss4), float(ref4))
    assert int(nptr4) == B

    print("KERNEL_OK")
</pallas_src>

<mosaic_0001>
module attributes {stable_mosaic.version = 11 : i64} {
  func.func @_loss_kernel(%arg0: i32, %arg1: memref<8x32xf32, #tpu.memory_space<vmem>>, %arg2: memref<32x8xf32, #tpu.memory_space<vmem>>, %arg3: memref<1x8xf32, #tpu.memory_space<vmem>>, %arg4: memref<8x1xf32, #tpu.memory_space<vmem>>, %arg5: memref<32x256xf32, #tpu.memory_space<vmem>>, %arg6: memref<1x256xf32, #tpu.memory_space<vmem>>, %arg7: memref<8x1xf32, #tpu.memory_space<vmem>>, %arg8: memref<8x1xf32, #tpu.memory_space<vmem>>, %arg9: memref<8x1xf32, #tpu.memory_space<vmem>>, %arg10: memref<8x1xf32, #tpu.memory_space<vmem>>, %arg11: memref<8x1xf32, #tpu.memory_space<vmem>>) attributes {dimension_semantics = [#tpu.dimension_semantics<arbitrary>], iteration_bounds = array<i64: 4>, scalar_prefetch = 0 : i64, scratch_operands = 4 : i64, tpu.core_type = #tpu.core_type<tc>, window_params = [{pipeline_mode = #tpu.pipeline_mode<synchronous>, transform_indices = @transform_0, window_bounds = array<i64: 8, 32>}, {pipeline_mode = #tpu.pipeline_mode<synchronous>, transform_indices = @transform_1, window_bounds = array<i64: 32, 8>}, {pipeline_mode = #tpu.pipeline_mode<synchronous>, transform_indices = @transform_2, window_bounds = array<i64: 1, 8>}, {pipeline_mode = #tpu.pipeline_mode<synchronous>, transform_indices = @transform_3, window_bounds = array<i64: 8, 1>}, {transform_indices = @transform_4, window_bounds = array<i64: 32, 256>}, {transform_indices = @transform_5, window_bounds = array<i64: 1, 256>}, {pipeline_mode = #tpu.pipeline_mode<synchronous>, transform_indices = @transform_6, window_bounds = array<i64: 8, 1>}]} {
    %c0 = arith.constant 0 : index
    %c0_0 = arith.constant 0 : index
    %0 = vector.load %arg4[%c0, %c0_0] : memref<8x1xf32, #tpu.memory_space<vmem>>, vector<8x1xf32>
    %c0_i32 = arith.constant 0 : i32
    %1 = arith.cmpi eq, %arg0, %c0_i32 : i32
    %2 = arith.extui %1 : i1 to i32
    %c0_i32_1 = arith.constant 0 : i32
    %3 = arith.cmpi ne, %2, %c0_i32_1 : i32
    scf.if %3 {
      %cst_32 = arith.constant -1.000000e+30 : f32
      %45 = vector.broadcast %cst_32 : f32 to vector<8x1xf32>
      %c0_33 = arith.constant 0 : index
      %c0_34 = arith.constant 0 : index
      %46 = vector.load %arg8[%c0_33, %c0_34] : memref<8x1xf32, #tpu.memory_space<vmem>>, vector<8x1xf32>
      tpu.vector_store %arg8[%c0_33, %c0_34], %45 {strides = array<i32>} : memref<8x1xf32, #tpu.memory_space<vmem>>, vector<8x1xf32>,
      %cst_35 = arith.constant 0.000000e+00 : f32
      %47 = vector.broadcast %cst_35 : f32 to vector<8x1xf32>
      %c0_36 = arith.constant 0 : index
      %c0_37 = arith.constant 0 : index
      %48 = vector.load %arg9[%c0_36, %c0_37] : memref<8x1xf32, #tpu.memory_space<vmem>>, vector<8x1xf32>
      tpu.vector_store %arg9[%c0_36, %c0_37], %47 {strides = array<i32>} : memref<8x1xf32, #tpu.memory_space<vmem>>, vector<8x1xf32>,
      %cst_38 = arith.constant 0.000000e+00 : f32
      %49 = vector.broadcast %cst_38 : f32 to vector<8x1xf32>
      %c0_39 = arith.constant 0 : index
      %c0_40 = arith.constant 0 : index
      %50 = vector.load %arg10[%c0_39, %c0_40] : memref<8x1xf32, #tpu.memory_space<vmem>>, vector<8x1xf32>
      tpu.vector_store %arg10[%c0_39, %c0_40], %49 {strides = array<i32>} : memref<8x1xf32, #tpu.memory_space<vmem>>, vector<8x1xf32>,
      %cst_41 = arith.constant 0.000000e+00 : f32
      %51 = vector.broadcast %cst_41 : f32 to vector<8x1xf32>
      %c0_42 = arith.constant 0 : index
      %c0_43 = arith.constant 0 : index
      %52 = vector.load %arg11[%c0_42, %c0_43] : memref<8x1xf32, #tpu.memory_space<vmem>>, vector<8x1xf32>
      tpu.vector_store %arg11[%c0_42, %c0_43], %51 {strides = array<i32>} : memref<8x1xf32, #tpu.memory_space<vmem>>, vector<8x1xf32>,
      %c0_44 = arith.constant 0 : index
      %c0_45 = arith.constant 0 : index
      %53 = vector.load %arg2[%c0_44, %c0_45] : memref<32x8xf32, #tpu.memory_space<vmem>>, vector<32x8xf32>
      %c0_46 = arith.constant 0 : index
      %c0_47 = arith.constant 0 : index
      %54 = vector.load %arg3[%c0_46, %c0_47] : memref<1x8xf32, #tpu.memory_space<vmem>>, vector<1x8xf32>
      %c0_48 = arith.constant 0 : index
      %c0_49 = arith.constant 0 : index
      %55 = vector.load %arg1[%c0_48, %c0_49] : memref<8x32xf32, #tpu.memory_space<vmem>>, vector<8x32xf32>
      %cst_50 = arith.constant dense<0.000000e+00> : vector<8x8xf32>
      %56 = tpu.matmul %55, %53, %cst_50 {dimension_numbers = #tpu.dot_dimension_numbers<[1], [0], [0], [1], [0, 0, 1, 1], [], []>} : vector<8x32xf32>, vector<32x8xf32>, vector<8x8xf32> -> vector<8x8xf32>
      %57 = vector.broadcast %54 : vector<1x8xf32> to vector<8x8xf32>
      %58 = vector.broadcast %0 : vector<8x1xf32> to vector<8x8xf32>
      %59 = arith.cmpf oeq, %57, %58 : vector<8x8xf32>
      %c0_51 = arith.constant 0 : index
      %c0_52 = arith.constant 0 : index
      %60 = vector.load %arg8[%c0_51, %c0_52] : memref<8x1xf32, #tpu.memory_space<vmem>>, vector<8x1xf32>
      %cst_53 = arith.constant dense<0xFF800000> : vector<8xf32>
      %61 = vector.multi_reduction <maximumf>, %56, %cst_53 [1] : vector<8x8xf32> to vector<8xf32>
      %62 = vector.shape_cast %61 : vector<8xf32> to vector<8x1xf32>
      %63 = arith.maximumf %60, %62 : vector<8x1xf32>
      %c0_54 = arith.constant 0 : index
      %c0_55 = arith.constant 0 : index
      %64 = vector.load %arg8[%c0_54, %c0_55] : memref<8x1xf32, #tpu.memory_space<vmem>>, vector<8x1xf32>
      %65 = arith.subf %64, %63 : vector<8x1xf32>
      %66 = math.exp %65 : vector<8x1xf32>
      %c0_56 = arith.constant 0 : index
      %c0_57 = arith.constant 0 : index
      %67 = vector.load %arg9[%c0_56, %c0_57] : memref<8x1xf32, #tpu.memory_space<vmem>>, vector<8x1xf32>
      %68 = arith.mulf %66, %67 : vector<8x1xf32>
      %69 = vector.broadcast %63 : vector<8x1xf32> to vector<8x8xf32>
      %70 = arith.subf %56, %69 : vector<8x8xf32>
      %71 = math.exp %70 : vector<8x8xf32>
      %cst_58 = arith.constant dense<0.000000e+00> : vector<8xf32>
      %72 = vector.multi_reduction <add>, %71, %cst_58 [1] : vector<8x8xf32> to vector<8xf32>
      %73 = vector.shape_cast %72 : vector<8xf32> to vector<8x1xf32>
      %74 = arith.addf %68, %73 : vector<8x1xf32>
      %c0_59 = arith.constant 0 : index
      %c0_60 = arith.constant 0 : index
      %75 = vector.load %arg9[%c0_59, %c0_60] : memref<8x1xf32, #tpu.memory_space<vmem>>, vector<8x1xf32>
      tpu.vector_store %arg9[%c0_59, %c0_60], %74 {strides = array<i32>} : memref<8x1xf32, #tpu.memory_space<vmem>>, vector<8x1xf32>,
      %c0_61 = arith.constant 0 : index
      %c0_62 = arith.constant 0 : index
      %76 = vector.load %arg8[%c0_61, %c0_62] : memref<8x1xf32, #tpu.memory_space<vmem>>, vector<8x1xf32>
      tpu.vector_store %arg8[%c0_61, %c0_62], %63 {strides = array<i32>} : memref<8x1xf32, #tpu.memory_space<vmem>>, vector<8x1xf32>,
      %c0_63 = arith.constant 0 : index
      %c0_64 = arith.constant 0 : index
      %77 = vector.load %arg10[%c0_63, %c0_64] : memref<8x1xf32, #tpu.memory_space<vmem>>, vector<8x1xf32>
      %cst_65 = arith.constant 0.000000e+00 : f32
      %78 = vector.broadcast %cst_65 : f32 to vector<8x8xf32>
      %79 = arith.select %59, %56, %78 : vector<8x8xi1>, vector<8x8xf32>
      %cst_66 = arith.constant dense<0.000000e+00> : vector<8xf32>
      %80 = vector.multi_reduction <add>, %79, %cst_66 [1] : vector<8x8xf32> to vector<8xf32>
      %81 = vector.shape_cast %80 : vector<8xf32> to vector<8x1xf32>
      %82 = arith.addf %77, %81 : vector<8x1xf32>
      %c0_67 = arith.constant 0 : index
      %c0_68 = arith.constant 0 : index
      %83 = vector.load %arg10[%c0_67, %c0_68] : memref<8x1xf32, #tpu.memory_space<vmem>>, vector<8x1xf32>
      tpu.vector_store %arg10[%c0_67, %c0_68], %82 {strides = array<i32>} : memref<8x1xf32, #tpu.memory_space<vmem>>, vector<8x1xf32>,
      %c0_69 = arith.constant 0 : index
      %c0_70 = arith.constant 0 : index
      %84 = vector.load %arg11[%c0_69, %c0_70] : memref<8x1xf32, #tpu.memory_space<vmem>>, vector<8x1xf32>
      %85 = arith.extui %59 : vector<8x8xi1> to vector<8x8xi32>
      %86 = arith.sitofp %85 : vector<8x8xi32> to vector<8x8xf32>
      %cst_71 = arith.constant dense<0.000000e+00> : vector<8xf32>
      %87 = vector.multi_reduction <add>, %86, %cst_71 [1] : vector<8x8xf32> to vector<8xf32>
      %88 = vector.shape_cast %87 : vector<8xf32> to vector<8x1xf32>
      %89 = arith.addf %84, %88 : vector<8x1xf32>
      %c0_72 = arith.constant 0 : index
      %c0_73 = arith.constant 0 : index
      %90 = vector.load %arg11[%c0_72, %c0_73] : memref<8x1xf32, #tpu.memory_space<vmem>>, vector<8x1xf32>
      tpu.vector_store %arg11[%c0_72, %c0_73], %89 {strides = array<i32>} : memref<8x1xf32, #tpu.memory_space<vmem>>, vector<8x1xf32>,
    } else {
    }
    %c0_2 = arith.constant 0 : index
    %c0_3 = arith.constant 0 : index
    %4 = vector.load %arg5[%c0_2, %c0_3] : memref<32x256xf32, #tpu.memory_space<vmem>>, vector<32x256xf32>
    %c0_4 = arith.constant 0 : index
    %c0_5 = arith.constant 0 : index
    %5 = vector.load %arg6[%c0_4, %c0_5] : memref<1x256xf32, #tpu.memory_space<vmem>>, vector<1x256xf32>
    %c0_6 = arith.constant 0 : index
    %c0_7 = arith.constant 0 : index
    %6 = vector.load %arg1[%c0_6, %c0_7] : memref<8x32xf32, #tpu.memory_space<vmem>>, vector<8x32xf32>
    %cst = arith.constant dense<0.000000e+00> : vector<8x256xf32>
    %7 = tpu.matmul %6, %4, %cst {dimension_numbers = #tpu.dot_dimension_numbers<[1], [0], [0], [1], [0, 0, 1, 1], [], []>} : vector<8x32xf32>, vector<32x256xf32>, vector<8x256xf32> -> vector<8x256xf32>
    %8 = vector.broadcast %5 : vector<1x256xf32> to vector<8x256xf32>
    %9 = vector.broadcast %0 : vector<8x1xf32> to vector<8x256xf32>
    %10 = arith.cmpf oeq, %8, %9 : vector<8x256xf32>
    %c0_8 = arith.constant 0 : index
    %c0_9 = arith.constant 0 : index
    %11 = vector.load %arg8[%c0_8, %c0_9] : memref<8x1xf32, #tpu.memory_space<vmem>>, vector<8x1xf32>
    %cst_10 = arith.constant dense<0xFF800000> : vector<8xf32>
    %12 = vector.multi_reduction <maximumf>, %7, %cst_10 [1] : vector<8x256xf32> to vector<8xf32>
    %13 = vector.shape_cast %12 : vector<8xf32> to vector<8x1xf32>
    %14 = arith.maximumf %11, %13 : vector<8x1xf32>
    %c0_11 = arith.constant 0 : index
    %c0_12 = arith.constant 0 : index
    %15 = vector.load %arg8[%c0_11, %c0_12] : memref<8x1xf32, #tpu.memory_space<vmem>>, vector<8x1xf32>
    %16 = arith.subf %15, %14 : vector<8x1xf32>
    %17 = math.exp %16 : vector<8x1xf32>
    %c0_13 = arith.constant 0 : index
    %c0_14 = arith.constant 0 : index
    %18 = vector.load %arg9[%c0_13, %c0_14] : memref<8x1xf32, #tpu.memory_space<vmem>>, vector<8x1xf32>
    %19 = arith.mulf %17, %18 : vector<8x1xf32>
    %20 = vector.broadcast %14 : vector<8x1xf32> to vector<8x256xf32>
    %21 = arith.subf %7, %20 : vector<8x256xf32>
    %22 = math.exp %21 : vector<8x256xf32>
    %cst_15 = arith.constant dense<0.000000e+00> : vector<8xf32>
    %23 = vector.multi_reduction <add>, %22, %cst_15 [1] : vector<8x256xf32> to vector<8xf32>
    %24 = vector.shape_cast %23 : vector<8xf32> to vector<8x1xf32>
    %25 = arith.addf %19, %24 : vector<8x1xf32>
    %c0_16 = arith.constant 0 : index
    %c0_17 = arith.constant 0 : index
    %26 = vector.load %arg9[%c0_16, %c0_17] : memref<8x1xf32, #tpu.memory_space<vmem>>, vector<8x1xf32>
    tpu.vector_store %arg9[%c0_16, %c0_17], %25 {strides = array<i32>} : memref<8x1xf32, #tpu.memory_space<vmem>>, vector<8x1xf32>,
    %c0_18 = arith.constant 0 : index
    %c0_19 = arith.constant 0 : index
    %27 = vector.load %arg8[%c0_18, %c0_19] : memref<8x1xf32, #tpu.memory_space<vmem>>, vector<8x1xf32>
    tpu.vector_store %arg8[%c0_18, %c0_19], %14 {strides = array<i32>} : memref<8x1xf32, #tpu.memory_space<vmem>>, vector<8x1xf32>,
    %c0_20 = arith.constant 0 : index
    %c0_21 = arith.constant 0 : index
    %28 = vector.load %arg10[%c0_20, %c0_21] : memref<8x1xf32, #tpu.memory_space<vmem>>, vector<8x1xf32>
    %cst_22 = arith.constant 0.000000e+00 : f32
    %29 = vector.broadcast %cst_22 : f32 to vector<8x256xf32>
    %30 = arith.select %10, %7, %29 : vector<8x256xi1>, vector<8x256xf32>
    %cst_23 = arith.constant dense<0.000000e+00> : vector<8xf32>
    %31 = vector.multi_reduction <add>, %30, %cst_23 [1] : vector<8x256xf32> to vector<8xf32>
    %32 = vector.shape_cast %31 : vector<8xf32> to vector<8x1xf32>
    %33 = arith.addf %28, %32 : vector<8x1xf32>
    %c0_24 = arith.constant 0 : index
    %c0_25 = arith.constant 0 : index
    %34 = vector.load %arg10[%c0_24, %c0_25] : memref<8x1xf32, #tpu.memory_space<vmem>>, vector<8x1xf32>
    tpu.vector_store %arg10[%c0_24, %c0_25], %33 {strides = array<i32>} : memref<8x1xf32, #tpu.memory_space<vmem>>, vector<8x1xf32>,
    %c0_26 = arith.constant 0 : index
    %c0_27 = arith.constant 0 : index
    %35 = vector.load %arg11[%c0_26, %c0_27] : memref<8x1xf32, #tpu.memory_space<vmem>>, vector<8x1xf32>
    %36 = arith.extui %10 : vector<8x256xi1> to vector<8x256xi32>
    %37 = arith.sitofp %36 : vector<8x256xi32> to vector<8x256xf32>
    %cst_28 = arith.constant dense<0.000000e+00> : vector<8xf32>
    %38 = vector.multi_reduction <add>, %37, %cst_28 [1] : vector<8x256xf32> to vector<8xf32>
    %39 = vector.shape_cast %38 : vector<8xf32> to vector<8x1xf32>
    %40 = arith.addf %35, %39 : vector<8x1xf32>
    %c0_29 = arith.constant 0 : index
    %c0_30 = arith.constant 0 : index
    %41 = vector.load %arg11[%c0_29, %c0_30] : memref<8x1xf32, #tpu.memory_space<vmem>>, vector<8x1xf32>
    tpu.vector_store %arg11[%c0_29, %c0_30], %40 {strides = array<i32>} : memref<8x1xf32, #tpu.memory_space<vmem>>, vector<8x1xf32>,
    %c3_i32 = arith.constant 3 : i32
    %42 = arith.cmpi eq, %arg0, %c3_i32 : i32
    %43 = arith.extui %42 : i1 to i32
    %c0_i32_31 = arith.constant 0 : i32
    %44 = arith.cmpi ne, %43, %c0_i32_31 : i32
    scf.if %44 {
      %c0_32 = arith.constant 0 : index
      %c0_33 = arith.constant 0 : index
      %45 = vector.load %arg8[%c0_32, %c0_33] : memref<8x1xf32, #tpu.memory_space<vmem>>, vector<8x1xf32>
      %c0_34 = arith.constant 0 : index
      %c0_35 = arith.constant 0 : index
      %46 = vector.load %arg9[%c0_34, %c0_35] : memref<8x1xf32, #tpu.memory_space<vmem>>, vector<8x1xf32>
      %47 = math.log %46 : vector<8x1xf32>
      %48 = arith.addf %45, %47 : vector<8x1xf32>
      %c0_36 = arith.constant 0 : index
      %c0_37 = arith.constant 0 : index
      %49 = vector.load %arg11[%c0_36, %c0_37] : memref<8x1xf32, #tpu.memory_space<vmem>>, vector<8x1xf32>
      %cst_38 = arith.constant 0.000000e+00 : f32
      %50 = vector.broadcast %cst_38 : f32 to vector<8x1xf32>
      %51 = arith.cmpf ogt, %49, %50 : vector<8x1xf32>
      %cst_39 = arith.constant 1.000000e+00 : f32
      %52 = vector.broadcast %cst_39 : f32 to vector<8x1xf32>
      %53 = arith.select %51, %49, %52 : vector<8x1xi1>, vector<8x1xf32>
      %c0_40 = arith.constant 0 : index
      %c0_41 = arith.constant 0 : index
      %54 = vector.load %arg10[%c0_40, %c0_41] : memref<8x1xf32, #tpu.memory_space<vmem>>, vector<8x1xf32>
      %55 = arith.mulf %49, %48 : vector<8x1xf32>
      %56 = arith.subf %54, %55 : vector<8x1xf32>
      %cst_42 = arith.constant 0.000000e+00 : f32
      %57 = vector.broadcast %cst_42 : f32 to vector<8x1xf32>
      %58 = arith.subf %57, %56 : vector<8x1xf32>
      %59 = arith.divf %58, %53 : vector<8x1xf32>
      %c0_43 = arith.constant 0 : index
      %c0_44 = arith.constant 0 : index
      %60 = vector.load %arg7[%c0_43, %c0_44] : memref<8x1xf32, #tpu.memory_space<vmem>>, vector<8x1xf32>
      tpu.vector_store %arg7[%c0_43, %c0_44], %59 {strides = array<i32>} : memref<8x1xf32, #tpu.memory_space<vmem>>, vector<8x1xf32>,
    } else {
    }
    return
  }
  func.func @transform_0(%arg0: i32) -> (i32, i32) {
    %c0_i32 = arith.constant 0 : i32
    %c0_i32_0 = arith.constant 0 : i32
    %c0_i32_1 = arith.constant 0 : i32
    return %c0_i32, %c0_i32_0 : i32, i32
  }
  func.func @transform_1(%arg0: i32) -> (i32, i32) {
    %c0_i32 = arith.constant 0 : i32
    %c0_i32_0 = arith.constant 0 : i32
    %c0_i32_1 = arith.constant 0 : i32
    return %c0_i32, %c0_i32_0 : i32, i32
  }
  func.func @transform_2(%arg0: i32) -> (i32, i32) {
    %c0_i32 = arith.constant 0 : i32
    %c0_i32_0 = arith.constant 0 : i32
    %c0_i32_1 = arith.constant 0 : i32
    return %c0_i32, %c0_i32_0 : i32, i32
  }
  func.func @transform_3(%arg0: i32) -> (i32, i32) {
    %c0_i32 = arith.constant 0 : i32
    %c0_i32_0 = arith.constant 0 : i32
    %c0_i32_1 = arith.constant 0 : i32
    return %c0_i32, %c0_i32_0 : i32, i32
  }
  func.func @transform_4(%arg0: i32) -> (i32, i32) {
    %c0_i32 = arith.constant 0 : i32
    %c0_i32_0 = arith.constant 0 : i32
    return %c0_i32, %arg0 : i32, i32
  }
  func.func @transform_5(%arg0: i32) -> (i32, i32) {
    %c0_i32 = arith.constant 0 : i32
    %c0_i32_0 = arith.constant 0 : i32
    return %c0_i32, %arg0 : i32, i32
  }
  func.func @transform_6(%arg0: i32) -> (i32, i32) {
    %c0_i32 = arith.constant 0 : i32
    %c0_i32_0 = arith.constant 0 : i32
    %c0_i32_1 = arith.constant 0 : i32
    return %c0_i32, %c0_i32_0 : i32, i32
  }
}

</mosaic_0001>

<llo_original>
// kernel: feature_cache_forward.1
$region0: #{feature_cache_forward.1}
  #allocation0 [shape = 'u32[]', space=smem, size = 0x4, offset = 0x4, fixed_abs, tag = 'smem constant byte address 0x4 - core index']
  #allocation1 [shape = 'u32[72,128]{1,0:T(1,128)}', space=vmem, size = 0x9000, scoped, tag = 'internal scratch']
  #allocation2 [shape = 'f32[8,1]{1,0:T(8,128)}', space=vmem, size = 0x1000, scoped, tag = 'scratch operand']
  #allocation3 [shape = 'f32[8,1]{1,0:T(8,128)}', space=vmem, size = 0x1000, scoped, tag = 'scratch operand']
  #allocation4 [shape = 'f32[8,1]{1,0:T(8,128)}', space=vmem, size = 0x1000, scoped, tag = 'scratch operand']
  #allocation5 [shape = 'f32[8,1]{1,0:T(8,128)}', space=vmem, size = 0x1000, scoped, tag = 'scratch operand']
  %s0 = inlined_call_operand.vmem [shape: f32[8,32], index: 0, kind: input, shape index: {}]
  %s1 = inlined_call_operand.hbm [shape: f32[32,8], index: 1, kind: input, shape index: {}]
  %s2 = inlined_call_operand.vmem [shape: f32[1,8], index: 2, kind: input, shape index: {}]
  %s3 = inlined_call_operand.vmem [shape: f32[8,1], index: 3, kind: input, shape index: {}]
  %s4 = inlined_call_operand.hbm [shape: f32[32,1024], index: 4, kind: input, shape index: {}]
  %s5 = inlined_call_operand.vmem [shape: f32[1,1024], index: 5, kind: input, shape index: {}]
  %s6 = inlined_call_operand.vmem [shape: f32[8,1], index: 6, kind: output, shape index: {}]
  %s7 = sld [smem:[#allocation0]]
  $region73: #{feature_cache_forward.1} parent=0
    _
  %s9 = ssub.s32 1, %s7
  %s10 = scalar_select 0, %s9, %s7
  $region1: #{feature_cache_forward.1} parent=0
    #allocation6 [shape = 'u8[16384]{0}', space=vmem, size = 0x4000, scoped, tag = 'input window, operand 1, single buffered']
    #allocation7 [shape = 's32[2]{0}', space=sflag, size = 0x8, scoped, tag = 'scoped memory for feature_cache_forward.1']
    #allocation8 [shape = 'u8[65536]{0}', space=vmem, size = 0x10000, scoped, tag = 'input window, operand 4']
    #allocation9 [shape = 's32[2]{0}', space=sflag, size = 0x8, scoped, tag = 'scoped memory for feature_cache_forward.1']
    %11 = vsyncpa [#allocation7], 0
    %12 = vsyncpa [#allocation9], 0
    %s13 = scalar_lea.sflag [#allocation9], 1
    %14 = vsyncpa %s13, 0
    loop: start=0, step=1, limit=6
    $region2: #{feature_cache_forward.1} parent=1 // loop_pre_header
      _
    $region3: #{feature_cache_forward.1} parent=1 // loop_header
      %s16 = sphi 0, %s20
      %p17 = scmp.ge.s32.totalorder %s16, 6
      %s24 = sphi 0, %s24
      %s26 = sphi 0, %s24
      %s27 = sphi 0, %s26
      %s41 = sphi 0, %s27
      %s45 = sphi 0, %s45
      %s47 = sphi 0, %s45
      %s48 = sphi 0, %s47
      %s62 = sphi 0, %s48
      %s66 = sphi 0, %s66
      %s68 = sphi 0, %s66
      %s69 = sphi 0, %s68
      %s83 = sphi 0, %s69
      %s87 = sphi 0, %s87
      %s89 = sphi 0, %s87
      %s90 = sphi 0, %s89
      %s104 = sphi 0, %s90
      %s110 = sphi 0, %s112
      %s113 = sphi 0, %s110
      %s114 = sphi 0, %s113
      %s130 = sphi 0, %s114
      %s136 = sphi 0, %s138
      %s139 = sphi 0, %s136
      %s140 = sphi 0, %s139
      %s156 = sphi 0, %s140
      %s160 = sphi 0, %s160
      %s162 = sphi 0, %s160
      %s163 = sphi 0, %s162
      %s177 = sphi 0, %s163
    $region4: #{feature_cache_forward.1} parent=1 // loop_header_branch
      %19 = sbr.rel (%p17) target = $region8
    $region5: #{feature_cache_forward.1} parent=1 // loop_body
      %s21 = ssub.s32 %s16, 1
      %s22 = ssub.s32 %s16, 2
      %s23 = sadd.s32 %s16, 1
      %s25 = sadd.s32 %s24, 1
      %p28 = scmp.eq.s32.totalorder %s16, 3
      %p29 = scmp.ne.s32.totalorder %s24, %s26
      %p30 = scmp.eq.s32.totalorder %s16, 0
      %p31 = por %p29, %p30
      %p32 = scmp.ne.s32.totalorder %s24, %s26
      %p33 = scmp.eq.s32.totalorder %s21, 3
      %p34 = por %p32, %p33
      %p35 = scmp.ne.s32.totalorder %s26, %s27
      %p36 = scmp.eq.s32.totalorder %s21, 0
      %p37 = por %p35, %p36
      %p38 = scmp.ne.s32.totalorder %s26, %s27
      %p39 = scmp.eq.s32.totalorder %s22, 3
      %p40 = por %p38, %p39
      %p42 = scmp.ne.s32.totalorder %s27, %s41
      %p43 = scmp.eq.s32.totalorder %s22, 0
      %p44 = por %p42, %p43
      %s46 = sadd.s32 %s45, 1
      %p49 = scmp.eq.s32.totalorder %s16, 3
      %p50 = scmp.ne.s32.totalorder %s45, %s47
      %p51 = scmp.eq.s32.totalorder %s16, 0
      %p52 = por %p50, %p51
      %p53 = scmp.ne.s32.totalorder %s45, %s47
      %p54 = scmp.eq.s32.totalorder %s21, 3
      %p55 = por %p53, %p54
      %p56 = scmp.ne.s32.totalorder %s47, %s48
      %p57 = scmp.eq.s32.totalorder %s21, 0
      %p58 = por %p56, %p57
      %p59 = scmp.ne.s32.totalorder %s47, %s48
      %p60 = scmp.eq.s32.totalorder %s22, 3
      %p61 = por %p59, %p60
      %p63 = scmp.ne.s32.totalorder %s48, %s62
      %p64 = scmp.eq.s32.totalorder %s22, 0
      %p65 = por %p63, %p64
      %s67 = sadd.s32 %s66, 1
      %p70 = scmp.eq.s32.totalorder %s16, 3
      %p71 = scmp.ne.s32.totalorder %s66, %s68
      %p72 = scmp.eq.s32.totalorder %s16, 0
      %p73 = por %p71, %p72
      %p74 = scmp.ne.s32.totalorder %s66, %s68
      %p75 = scmp.eq.s32.totalorder %s21, 3
      %p76 = por %p74, %p75
      %p77 = scmp.ne.s32.totalorder %s68, %s69
      %p78 = scmp.eq.s32.totalorder %s21, 0
      %p79 = por %p77, %p78
      %p80 = scmp.ne.s32.totalorder %s68, %s69
      %p81 = scmp.eq.s32.totalorder %s22, 3
      %p82 = por %p80, %p81
      %p84 = scmp.ne.s32.totalorder %s69, %s83
      %p85 = scmp.eq.s32.totalorder %s22, 0
      %p86 = por %p84, %p85
      %s88 = sadd.s32 %s87, 1
      %p91 = scmp.eq.s32.totalorder %s16, 3
      %p92 = scmp.ne.s32.totalorder %s87, %s89
      %p93 = scmp.eq.s32.totalorder %s16, 0
      %p94 = por %p92, %p93
      %p95 = scmp.ne.s32.totalorder %s87, %s89
      %p96 = scmp.eq.s32.totalorder %s21, 3
      %p97 = por %p95, %p96
      %p98 = scmp.ne.s32.totalorder %s89, %s90
      %p99 = scmp.eq.s32.totalorder %s21, 0
      %p100 = por %p98, %p99
      %p101 = scmp.ne.s32.totalorder %s89, %s90
      %p102 = scmp.eq.s32.totalorder %s22, 3
      %p103 = por %p101, %p102
      %p105 = scmp.ne.s32.totalorder %s90, %s104
      %p106 = scmp.eq.s32.totalorder %s22, 0
      %p107 = por %p105, %p106
      %s108 = ssub.s32 %s16, %s23
      %p109 = scmp.eq.s32.totalorder %s108, 0
      %s111 = sadd.s32 %s110, 1
      %s112 = scalar_select %p109, %s110, %s111
      %p115 = pneg %p109
      %p116 = scmp.eq.s32.totalorder %s16, 3
      %p117 = por %p115, %p116
      %p118 = scmp.ne.s32.totalorder %s110, %s113
      %p119 = scmp.eq.s32.totalorder %s16, 0
      %p120 = por %p118, %p119
      %p121 = scmp.ne.s32.totalorder %s110, %s113
      %p122 = scmp.eq.s32.totalorder %s21, 3
      %p123 = por %p121, %p122
      %p124 = scmp.ne.s32.totalorder %s113, %s114
      %p125 = scmp.eq.s32.totalorder %s21, 0
      %p126 = por %p124, %p125
      %p127 = scmp.ne.s32.totalorder %s113, %s114
      %p128 = scmp.eq.s32.totalorder %s22, 3
      %p129 = por %p127, %p128
      %p131 = scmp.ne.s32.totalorder %s114, %s130
      %p132 = scmp.eq.s32.totalorder %s22, 0
      %p133 = por %p131, %p132
      %s134 = ssub.s32 %s16, %s23
      %p135 = scmp.eq.s32.totalorder %s134, 0
      %s137 = sadd.s32 %s136, 1
      %s138 = scalar_select %p135, %s136, %s137
      %p141 = pneg %p135
      %p142 = scmp.eq.s32.totalorder %s16, 3
      %p143 = por %p141, %p142
      %p144 = scmp.ne.s32.totalorder %s136, %s139
      %p145 = scmp.eq.s32.totalorder %s16, 0
      %p146 = por %p144, %p145
      %p147 = scmp.ne.s32.totalorder %s136, %s139
      %p148 = scmp.eq.s32.totalorder %s21, 3
      %p149 = por %p147, %p148
      %p150 = scmp.ne.s32.totalorder %s139, %s140
      %p151 = scmp.eq.s32.totalorder %s21, 0
      %p152 = por %p150, %p151
      %p153 = scmp.ne.s32.totalorder %s139, %s140
      %p154 = scmp.eq.s32.totalorder %s22, 3
      %p155 = por %p153, %p154
      %p157 = scmp.ne.s32.totalorder %s140, %s156
      %p158 = scmp.eq.s32.totalorder %s22, 0
      %p159 = por %p157, %p158
      %s161 = sadd.s32 %s160, 1
      %p164 = scmp.eq.s32.totalorder %s16, 3
      %p165 = scmp.ne.s32.totalorder %s160, %s162
      %p166 = scmp.eq.s32.totalorder %s16, 0
      %p167 = por %p165, %p166
      %p168 = scmp.ne.s32.totalorder %s160, %s162
      %p169 = scmp.eq.s32.totalorder %s21, 3
      %p170 = por %p168, %p169
      %p171 = scmp.ne.s32.totalorder %s162, %s163
      %p172 = scmp.eq.s32.totalorder %s21, 0
      %p173 = por %p171, %p172
      %p174 = scmp.ne.s32.totalorder %s162, %s163
      %p175 = scmp.eq.s32.totalorder %s22, 3
      %p176 = por %p174, %p175
      %p178 = scmp.ne.s32.totalorder %s163, %s177
      %p179 = scmp.eq.s32.totalorder %s22, 0
      %p180 = por %p178, %p179
      %p181 = scmp.le.s32.totalorder 1, %s16
      %p182 = scmp.lt.s32.totalorder %s16, 5
      %p183 = pnand %p181, %p182
      %p184 = pneg %p183
      // Predicated region
      $region9: #{feature_cache_forward.1} parent=5 // pred_check
        _
      $region10: #{feature_cache_forward.1} parent=5 // pred_check_branch
        %186 = sbr.rel (%p183) target = $region12
      $region11: #{feature_cache_forward.1} parent=5 // pred_region
        %s187 = ssub.s32 %s16, 1
        // Predicated region
        $region13: #{feature_cache_forward.1} parent=11 // pred_check
          %p188 = pneg %p37
        $region14: #{feature_cache_forward.1} parent=11 // pred_check_branch
          %190 = sbr.rel (%p188) target = $region16
        $region15: #{feature_cache_forward.1} parent=11 // pred_region
          _
        $region16: #{feature_cache_forward.1} parent=11 // pred_fallthru
          _
        // Predicated region
        $region17: #{feature_cache_forward.1} parent=11 // pred_check
          %p191 = pneg %p58
        $region18: #{feature_cache_forward.1} parent=11 // pred_check_branch
          %193 = sbr.rel (%p191) target = $region20
        $region19: #{feature_cache_forward.1} parent=11 // pred_region
          %195 = vsyncadd [#allocation7], 0
          %s196 = sshll.u32 %s1, 4
          %s197 = int_to_ptr.hbm [resolvable:$true] %s196
          %s198 = sshll.u32 [#allocation6], 4
          %s199 = int_to_ptr.vmem [resolvable:$true] %s198
          %204 = dma.hbm_to_vmem [thread:$0]  %s197, 512, %s199, [#allocation7], 128, 128, 8
        $region20: #{feature_cache_forward.1} parent=11 // pred_fallthru
          _
        // Predicated region
        $region21: #{feature_cache_forward.1} parent=11 // pred_check
          %p205 = pneg %p79
        $region22: #{feature_cache_forward.1} parent=11 // pred_check_branch
          %207 = sbr.rel (%p205) target = $region24
        $region23: #{feature_cache_forward.1} parent=11 // pred_region
          _
        $region24: #{feature_cache_forward.1} parent=11 // pred_fallthru
          _
        // Predicated region
        $region25: #{feature_cache_forward.1} parent=11 // pred_check
          %p208 = pneg %p100
        $region26: #{feature_cache_forward.1} parent=11 // pred_check_branch
          %210 = sbr.rel (%p208) target = $region28
        $region27: #{feature_cache_forward.1} parent=11 // pred_region
          _
        $region28: #{feature_cache_forward.1} parent=11 // pred_fallthru
          _
      $region12: #{feature_cache_forward.1} parent=5 // pred_fallthru
        _
      %p211 = scmp.lt.s32.totalorder %s16, 4
      // Predicated region
      $region29: #{feature_cache_forward.1} parent=5 // pred_check
        %p212 = pneg %p211
      $region30: #{feature_cache_forward.1} parent=5 // pred_check_branch
        %214 = sbr.rel (%p212) target = $region32
      $region31: #{feature_cache_forward.1} parent=5 // pred_region
        // Predicated region
        $region33: #{feature_cache_forward.1} parent=31 // pred_check
          %p215 = pneg %p120
        $region34: #{feature_cache_forward.1} parent=31 // pred_check_branch
          %217 = sbr.rel (%p215) target = $region36
        $region35: #{feature_cache_forward.1} parent=31 // pred_region
          %s218 = sand.u32 %s110, 1
          %s219 = scalar_lea.sflag [#allocation9], %s218
          %s220 = sand.u32 %s110, 1
          %s221 = smul.addr %s220, 64
          %s222 = scalar_lea.vmem [#allocation8], %s221
          %s223 = smul.u32 2, %s16
          %225 = vsyncadd %s219, 0
          %s226 = smul.addr %s223, 8
          %s227 = scalar_lea.hbm %s4, %s226
          %s228 = sshll.u32 %s227, 4
          %s229 = int_to_ptr.hbm [resolvable:$true] %s228
          %s230 = sshll.u32 %s222, 4
          %s231 = int_to_ptr.vmem [resolvable:$true] %s230
          %236 = dma.hbm_to_vmem [thread:$0]  %s229, 1024, %s231, %s219, 1024, 256, 16
        $region36: #{feature_cache_forward.1} parent=31 // pred_fallthru
          _
        // Predicated region
        $region37: #{feature_cache_forward.1} parent=31 // pred_check
          %p237 = pneg %p146
        $region38: #{feature_cache_forward.1} parent=31 // pred_check_branch
          %239 = sbr.rel (%p237) target = $region40
        $region39: #{feature_cache_forward.1} parent=31 // pred_region
          %s240 = smul.u32 2, %s16
          %p241 = scmp.lt.s32.totalorder %s240, 7
          %s242 = scalar_select %p241, %s240, 7
          %s243 = scalar_lea.vmem %s5, %s242
          %s244 = smul.u32 2, %s16
        $region40: #{feature_cache_forward.1} parent=31 // pred_fallthru
          _
      $region32: #{feature_cache_forward.1} parent=5 // pred_fallthru
        _
      %p245 = scmp.le.s32.totalorder 1, %s16
      %p246 = scmp.lt.s32.totalorder %s16, 5
      %p247 = pnand %p245, %p246
      %p248 = pneg %p247
      // Predicated region
      $region41: #{feature_cache_forward.1} parent=5 // pred_check
        _
      $region42: #{feature_cache_forward.1} parent=5 // pred_check_branch
        %250 = sbr.rel (%p247) target = $region44
      $region43: #{feature_cache_forward.1} parent=5 // pred_region
        %s251 = ssub.s32 %s16, 1
        // Predicated region
        $region45: #{feature_cache_forward.1} parent=43 // pred_check
          %p252 = pneg %p58
        $region46: #{feature_cache_forward.1} parent=43 // pred_check_branch
          %254 = sbr.rel (%p252) target = $region48
        $region47: #{feature_cache_forward.1} parent=43 // pred_region
          %256 = dma.done [#allocation7], 512
        $region48: #{feature_cache_forward.1} parent=43 // pred_fallthru
          _
        %s257 = sand.u32 %s113, 1
        %s258 = scalar_lea.sflag [#allocation9], %s257
        %s259 = sand.u32 %s113, 1
        %s260 = smul.addr %s259, 64
        %s261 = scalar_lea.vmem [#allocation8], %s260
        // Predicated region
        $region49: #{feature_cache_forward.1} parent=43 // pred_check
          %p262 = pneg %p126
        $region50: #{feature_cache_forward.1} parent=43 // pred_check_branch
          %264 = sbr.rel (%p262) target = $region52
        $region51: #{feature_cache_forward.1} parent=43 // pred_region
          %266 = dma.done %s258, 1024
        $region52: #{feature_cache_forward.1} parent=43 // pred_fallthru
          _
        %p267 = pneg %p37
        %p268 = pneg %p34
        %p269 = pneg %p58
        %p270 = pneg %p55
        %p271 = pneg %p79
        %p272 = pneg %p76
        %p273 = pneg %p100
        %p274 = pneg %p97
        %s275 = sand.u32 %s113, 1
        %s276 = scalar_lea.sflag [#allocation9], %s275
        %s277 = sand.u32 %s113, 1
        %s278 = smul.addr %s277, 64
        %s279 = scalar_lea.vmem [#allocation8], %s278
        %p280 = pneg %p126
        %p281 = pneg %p123
        %s282 = smul.u32 2, %s21
        %p283 = scmp.lt.s32.totalorder %s282, 7
        %s284 = scalar_select %p283, %s282, 7
        %s285 = scalar_lea.vmem %s5, %s284
        %p286 = pneg %p152
        %p287 = pneg %p149
        %p288 = pneg %p173
        %p289 = pneg %p170
        %s290 = smul.u32 2, %s21
        %s291 = smul.u32 2, %s21
        %p292 = scmp.lt.s32.totalorder %s291, 7
        %s293 = scalar_select %p292, %s291, 7
        %s294 = scalar_lea.vmem %s5, %s293
        %s295 = smul.u32 2, %s21
        %v296 = vld [vmem:[%s3] sm:$0xff]
        %p297 = scmp.eq.s32.totalorder %s21, 0
        // Predicated region
        $region53: #{feature_cache_forward.1} parent=43 // pred_check
          %p298 = pneg %p297
        $region54: #{feature_cache_forward.1} parent=43 // pred_check_branch
          %300 = sbr.rel (%p298) target = $region56
        $region55: #{feature_cache_forward.1} parent=43 // pred_region
          %vm301 = vcmask 7168
          %302 = vst.msk [vmem:[#allocation2] sm:$0xff] %vm301, -1e+30
          %303 = vst.msk [vmem:[#allocation3] sm:$0xff] %vm301, 0.0
          %304 = vst.msk [vmem:[#allocation4] sm:$0xff] %vm301, 0.0
          %305 = vst.msk [vmem:[#allocation5] sm:$0xff] %vm301, 0.0
          %v306 = vld [vmem:[#allocation6] sm:$0xff]
          %v307 = vld [vmem:[#allocation6 + $0x8] sm:$0xff]
          %v308 = vld [vmem:[#allocation6 + $0x10] sm:$0xff]
          %v309 = vld [vmem:[#allocation6 + $0x18] sm:$0xff]
          %v310 = vld [vmem:[%s2] sm:$0x1]
          %v311 = vld [vmem:[%s0] sm:$0xff]
          %vm312 = vcmask 261120
          %v314 = vsel %vm312, %v311, 0
          %316 = vmatpush.msra.mxu0 0.0
          %317 = vmatpush.msra.mxu0 0.0
          %318 = vmatpush.msra.mxu0 0.0
          %319 = vmatpush.msra.mxu0 0.0
          %320 = vmatpush.msra.mxu0 0.0
          %321 = vmatpush.msra.mxu0 0.0
          %322 = vmatpush.msra.mxu0 0.0
          %323 = vmatpush.msra.mxu0 0.0
          %324 = vmatpush.msra.mxu0 0.0
          %325 = vmatpush.msra.mxu0 0.0
          %326 = vmatpush.msra.mxu0 0.0
          %327 = vmatpush.msra.mxu0 0.0
          %328 = vmatpush.msra.mxu0 %v309
          %329 = vmatpush.msra.mxu0 %v308
          %330 = vmatpush.msra.mxu0 %v307
          %331 = vmatpush.msra.mxu0 %v306
          %332 = vmatmul.f32.gmra.mxu0 %v314
          %v333 = vpop.f32.mrf.mxu0
          %v334 = vadd.f32 0.0, %v333
          %335 = vdwg.mxu0
          %v337 = vperm.slane %v310, 0
          %340 = vset.pattern.permute.xlu0 0
          %341 = vperm.xlu0 %340, %v296
          %v342 = vpop.permute.xlu0 %341
          %vm344 = vcmp.eq.f32.partialorder %v337, %v342
          %v345 = vld [vmem:[#allocation2] sm:$0xff]
          %vm346 = vcmask 64512
          %v347 = vsel %vm346, %v334, -inf
          %348 = vmax.xlane.f32.xlu0 %v347
          %v349 = vpop.xlane.xlu0 %348
          %v350 = vmax.f32 %v345, %v349
          %v351 = vsub.f32 %v345, %v350
          %v352 = vmul.f32 %v351, 1.442695
          %v353 = vpow.pop %v352
          %v354 = vld [vmem:[#allocation3] sm:$0xff]
          %v355 = vmul.f32 %v353, %v354
          %357 = vset.pattern.permute.xlu0 0
          %358 = vperm.xlu0 %357, %v350
          %v359 = vpop.permute.xlu0 %358
          %v361 = vsub.f32 %v334, %v359
          %v362 = vmul.f32 %v361, 1.442695
          %v363 = vpow.pop %v362
          %v364 = vsel %vm346, %v363, 0.0
          %365 = vadd.xlane.f32.xlu0 %v364
          %v366 = vpop.xlane.xlu0 %365
          %v367 = vadd.f32 %v355, %v366
          %368 = vst.msk [vmem:[#allocation3] sm:$0xff] %vm301, %v367
          %369 = vst.msk [vmem:[#allocation2] sm:$0xff] %vm301, %v350
          %v370 = vld [vmem:[#allocation4] sm:$0xff]
          %v371 = vsel %vm344, %v334, 0.0
          %v372 = vsel %vm346, %v371, 0.0
          %373 = vadd.xlane.f32.xlu0 %v372
          %v374 = vpop.xlane.xlu0 %373
          %v375 = vadd.f32 %v370, %v374
          %376 = vst.msk [vmem:[#allocation4] sm:$0xff] %vm301, %v375
          %v377 = vld [vmem:[#allocation5] sm:$0xff]
          %v378 = vsel %vm344, 1, 0
          %v379 = vcvt.s32.f32 %v378
          %v380 = vsel %vm346, %v379, 0.0
          %381 = vadd.xlane.f32.xlu0 %v380
          %v382 = vpop.xlane.xlu0 %381
          %v383 = vadd.f32 %v377, %v382
          %384 = vst.msk [vmem:[#allocation5] sm:$0xff] %vm301, %v383
        $region56: #{feature_cache_forward.1} parent=43 // pred_fallthru
          _
        %v385 = vld [vmem:[%s261] sm:$0xff]
        %v386 = vld [vmem:[%s261 + $0x8] sm:$0xff]
        %v387 = vld [vmem:[%s261 + $0x10] sm:$0xff]
        %v388 = vld [vmem:[%s261 + $0x18] sm:$0xff]
        %v389 = vld [vmem:[%s261 + $0x20] sm:$0xff]
        %v390 = vld [vmem:[%s261 + $0x28] sm:$0xff]
        %v391 = vld [vmem:[%s261 + $0x30] sm:$0xff]
        %v392 = vld [vmem:[%s261 + $0x38] sm:$0xff]
        %v393 = vld [vmem:[%s294] sm:$0x3]
        %v394 = vld [vmem:[%s0] sm:$0xff]
        %vm395 = vcmask 261120
        %v397 = vsel %vm395, %v394, 0
        %399 = vmatpush.msra.mxu0 0.0
        %400 = vmatpush.msra.mxu0 0.0
        %401 = vmatpush.msra.mxu0 0.0
        %402 = vmatpush.msra.mxu0 0.0
        %403 = vmatpush.msra.mxu0 0.0
        %404 = vmatpush.msra.mxu0 0.0
        %405 = vmatpush.msra.mxu0 0.0
        %406 = vmatpush.msra.mxu0 0.0
        %407 = vmatpush.msra.mxu0 0.0
        %408 = vmatpush.msra.mxu0 0.0
        %409 = vmatpush.msra.mxu0 0.0
        %410 = vmatpush.msra.mxu0 0.0
        %411 = vmatpush.msra.mxu0 %v391
        %412 = vmatpush.msra.mxu0 %v389
        %413 = vmatpush.msra.mxu0 %v387
        %414 = vmatpush.msra.mxu0 %v385
        %415 = vmatmul.f32.gmra.mxu0 %v397
        %v416 = vpop.f32.mrf.mxu0
        %v417 = vadd.f32 0.0, %v416
        %418 = vdwg.mxu0
        %419 = vmatpush.msra.mxu0 0.0
        %420 = vmatpush.msra.mxu0 0.0
        %421 = vmatpush.msra.mxu0 0.0
        %422 = vmatpush.msra.mxu0 0.0
        %423 = vmatpush.msra.mxu0 0.0
        %424 = vmatpush.msra.mxu0 0.0
        %425 = vmatpush.msra.mxu0 0.0
        %426 = vmatpush.msra.mxu0 0.0
        %427 = vmatpush.msra.mxu0 0.0
        %428 = vmatpush.msra.mxu0 0.0
        %429 = vmatpush.msra.mxu0 0.0
        %430 = vmatpush.msra.mxu0 0.0
        %431 = vmatpush.msra.mxu0 %v392
        %432 = vmatpush.msra.mxu0 %v390
        %433 = vmatpush.msra.mxu0 %v388
        %434 = vmatpush.msra.mxu0 %v386
        %435 = vmatmul.f32.gmra.mxu0 %v397
        %v436 = vpop.f32.mrf.mxu0
        %v437 = vadd.f32 0.0, %v436
        %438 = vdwg.mxu0
        %v440 = vperm.slane %v393, 0
        %v441 = vperm.slane %v393, 1
        %445 = vset.pattern.permute.xlu0 0
        %446 = vperm.xlu0 %445, %v296
        %v447 = vpop.permute.xlu0 %446
        %vm449 = vcmp.eq.f32.partialorder %v440, %v447
        %vm450 = vcmp.eq.f32.partialorder %v441, %v447
        %v451 = vld [vmem:[#allocation2] sm:$0xff]
        %v452 = vmax.f32 %v417, %v437
        %453 = vmax.xlane.f32.xlu0 %v452
        %v454 = vpop.xlane.xlu0 %453
        %v455 = vmax.f32 %v451, %v454
        %v456 = vsub.f32 %v451, %v455
        %v457 = vmul.f32 %v456, 1.442695
        %v458 = vpow.pop %v457
        %v459 = vld [vmem:[#allocation3] sm:$0xff]
        %v460 = vmul.f32 %v458, %v459
        %462 = vset.pattern.permute.xlu0 0
        %463 = vperm.xlu0 %462, %v455
        %v464 = vpop.permute.xlu0 %463
        %v466 = vsub.f32 %v417, %v464
        %v467 = vsub.f32 %v437, %v464
        %v468 = vmul.f32 %v466, 1.442695
        %v469 = vpow.pop %v468
        %v470 = vmul.f32 %v467, 1.442695
        %v471 = vpow.pop %v470
        %v472 = vadd.f32 %v469, %v471
        %473 = vadd.xlane.f32.xlu0 %v472
        %v474 = vpop.xlane.xlu0 %473
        %v475 = vadd.f32 %v460, %v474
        %vm476 = vcmask 7168
        %477 = vst.msk [vmem:[#allocation3] sm:$0xff] %vm476, %v475
        %478 = vst.msk [vmem:[#allocation2] sm:$0xff] %vm476, %v455
        %v479 = vld [vmem:[#allocation4] sm:$0xff]
        %v480 = vsel %vm449, %v417, 0.0
        %v481 = vsel %vm450, %v437, 0.0
        %v482 = vadd.f32 %v480, %v481
        %483 = vadd.xlane.f32.xlu0 %v482
        %v484 = vpop.xlane.xlu0 %483
        %v485 = vadd.f32 %v479, %v484
        %486 = vst.msk [vmem:[#allocation4] sm:$0xff] %vm476, %v485
        %v487 = vld [vmem:[#allocation5] sm:$0xff]
        %v488 = vsel %vm449, 1, 0
        %v489 = vsel %vm450, 1, 0
        %v490 = vcvt.s32.f32 %v488
        %v491 = vcvt.s32.f32 %v489
        %v492 = vadd.f32 %v490, %v491
        %493 = vadd.xlane.f32.xlu0 %v492
        %v494 = vpop.xlane.xlu0 %493
        %v495 = vadd.f32 %v487, %v494
        %496 = vst.msk [vmem:[#allocation5] sm:$0xff] %vm476, %v495
        %p497 = scmp.eq.s32.totalorder %s21, 3
        // Predicated region
        $region57: #{feature_cache_forward.1} parent=43 // pred_check
          %p498 = pneg %p497
        $region58: #{feature_cache_forward.1} parent=43 // pred_check_branch
          %500 = sbr.rel (%p498) target = $region60
        $region59: #{feature_cache_forward.1} parent=43 // pred_region
          %v501 = vld [vmem:[#allocation2] sm:$0xff]
          %v502 = vld [vmem:[#allocation3] sm:$0xff]
          %v503 = vlog2.pop %v502
          %v504 = vmul.f32 %v503, 0.6931472
          %v505 = vadd.f32 %v501, %v504
          %v506 = vld [vmem:[#allocation5] sm:$0xff]
          %vm507 = vcmp.gt.f32.partialorder %v506, 0.0
          %v508 = vsel %vm507, %v506, 1.0
          %v509 = vld [vmem:[#allocation4] sm:$0xff]
          %v510 = vmul.f32 %v506, %v505
          %v511 = vsub.f32 %v509, %v510
          %v512 = vsub.f32 0.0, %v511
          %v513 = vrcp.pop %v508
          %v514 = vmul.f32 %v508, %v513
          %v515 = vsub.f32 1.0, %v514
          %v516 = vmul.f32 %v513, %v515
          %v517 = vadd.f32 %v513, %v516
          %vm518 = vweird.f32 %v508
          %vm519 = vweird.f32 %v513
          %vm520 = vmor %vm518, %vm519
          %v521 = vsel %vm520, %v513, %v517
          %v522 = vand.u32 2147483647, %v508
          %vm523 = vcmp.eq.f32.partialorder %v522, 8.507059e+37
          %v524 = vand.u32 %v508, 2147483648
          %v525 = vor.u32 1.1754944e-38, %v524
          %v526 = vsel %vm523, %v525, %v521
          %v527 = vmul.f32 %v512, %v526
          %528 = vst.msk [vmem:[%s6] sm:$0xff] %vm476, %v527
        $region60: #{feature_cache_forward.1} parent=43 // pred_fallthru
          _
        // Predicated region
        $region61: #{feature_cache_forward.1} parent=43 // pred_check
          %p529 = pneg %p170
        $region62: #{feature_cache_forward.1} parent=43 // pred_check_branch
          %531 = sbr.rel (%p529) target = $region64
        $region63: #{feature_cache_forward.1} parent=43 // pred_region
          _
        $region64: #{feature_cache_forward.1} parent=43 // pred_fallthru
          _
        // Predicated region
        $region65: #{feature_cache_forward.1} parent=43 // pred_check
          %p532 = pneg %p170
        $region66: #{feature_cache_forward.1} parent=43 // pred_check_branch
          %534 = sbr.rel (%p532) target = $region68
        $region67: #{feature_cache_forward.1} parent=43 // pred_region
          _
        $region68: #{feature_cache_forward.1} parent=43 // pred_fallthru
          _
      $region44: #{feature_cache_forward.1} parent=5 // pred_fallthru
        _
      %p535 = scmp.le.s32.totalorder 2, %s16
      // Predicated region
      $region69: #{feature_cache_forward.1} parent=5 // pred_check
        %p536 = pneg %p535
      $region70: #{feature_cache_forward.1} parent=5 // pred_check_branch
        %538 = sbr.rel (%p536) target = $region72
      $region71: #{feature_cache_forward.1} parent=5 // pred_region
        %s539 = ssub.s32 %s16, 2
      $region72: #{feature_cache_forward.1} parent=5 // pred_fallthru
        _
    $region6: #{feature_cache_forward.1} parent=1 // loop_footer
      %s20 = sadd.s32 1, %s16
    $region7: #{feature_cache_forward.1} parent=1 // loop_footer_branch
      %15 = sbr.rel target = $region3
    $region8: #{feature_cache_forward.1} parent=1 // loop_exit
      _
    %540 = vsyncpa [#allocation7], 1
    %s541 = scalar_lea.sflag [#allocation7], 1
    %542 = vsyncpa %s541, 1
    %543 = vsyncpa [#allocation9], 1
    %s544 = scalar_lea.sflag [#allocation9], 1
    %545 = vsyncpa %s544, 1

</llo_original>
